<compile_context>
chip_gen: v7x
topology: tpu7x:2x2x1
jax: 0.10.0
libtpu: 0.0.40
codegen_flags: <defaults>
</compile_context>

<pallas_src>
import math

import jax
import jax.numpy as jnp
from jax import lax
from jax.experimental import pallas as pl
from jax.experimental.pallas import tpu as pltpu

_LANE = 128
# Matches the torch constant 2 * 3.141592653 used in the module.
_HALF_LOG_2PI = 0.5 * math.log(2.0 * 3.141592653)


def _mlp_head_t(x, w1, b1, w2, b2, w3, b3, wo, bo):
    """Transposed MLP: features on sublanes, batch on lanes.

    x: (S+1, bt); w*: torch-layout (out, in); b*: (out, 1).
    Returns mean (1, bt), var (1, bt).
    """
    h = jnp.maximum(jnp.dot(w1, x, preferred_element_type=jnp.float32) + b1, 0.0)
    h = jnp.maximum(jnp.dot(w2, h, preferred_element_type=jnp.float32) + b2, 0.0)
    h = jnp.tanh(jnp.dot(w3, h, preferred_element_type=jnp.float32) + b3)
    p = jnp.dot(wo, h, preferred_element_type=jnp.float32) + bo      # (A1, bt)
    mean = jnp.clip(p[0:1, :], -2.0, 2.0)
    p1 = p[1:2, :]
    var = jnp.minimum(jnp.float32(1.0), p1 * p1) + jnp.float32(0.01)
    return mean, var


def rws_cont_policy_forward(state, action, optim, params, *, b_tile=2048):
    """state: (B, S) f32, action: (B,) f32, optim: (B,) or (B, 1) f32.

    params: list of (w, b) with w stored (in_features, out_features), b (1, out).
    Returns log_prob of shape (B,).
    """
    assert b_tile % _LANE == 0
    state = jnp.asarray(state, jnp.float32)
    optim = jnp.asarray(optim, jnp.float32).reshape(-1, 1)
    action = jnp.asarray(action, jnp.float32).reshape(-1)

    B, S = state.shape
    (w1, b1), (w2, b2), (w3, b3), (wo, bo) = params
    H = w1.shape[1]
    A1 = wo.shape[1]                                        # action_size + 1

    # --- wrapper-side layout prep: everything transposed & lane-dense ------
    x_t = jnp.concatenate([state, optim], axis=1).T         # (S+1, B)
    w1_t = jnp.transpose(w1)                                 # (H, S+1)
    w2_t = jnp.transpose(w2)                                 # (H, H)
    w3_t = jnp.transpose(w3)                                 # (H, H)
    wo_t = jnp.transpose(wo)                                 # (A1, H)
    b1_c = jnp.reshape(b1, (H, 1))
    b2_c = jnp.reshape(b2, (H, 1))
    b3_c = jnp.reshape(b3, (H, 1))
    bo_c = jnp.reshape(bo, (A1, 1))

    # Batch tiling: lane-aligned; single grid step whenever B fits one tile.
    if B <= b_tile:
        bt = max(_LANE, ((B + _LANE - 1) // _LANE) * _LANE)
    else:
        bt = b_tile
    Bp = ((B + bt - 1) // bt) * bt
    nt = Bp // bt

    if Bp != B:
        pad = Bp - B
        x_t = jnp.pad(x_t, ((0, 0), (0, pad)))
        action = jnp.pad(action, (0, pad))
    act_row = action.reshape(1, Bp)                          # (1, Bp) lane-dense
    mask_row = (jnp.arange(Bp) < B).astype(jnp.float32).reshape(1, Bp)

    in_specs = [
        pl.BlockSpec((S + 1, bt), lambda i: (0, i)),   # x^T tile
        pl.BlockSpec((1, bt), lambda i: (0, i)),       # action tile (lane-dense)
        pl.BlockSpec((1, bt), lambda i: (0, i)),       # validity mask tile
        pl.BlockSpec((H, S + 1), lambda i: (0, 0)),    # w1^T   -- VMEM-resident
        pl.BlockSpec((H, 1), lambda i: (0, 0)),        # b1
        pl.BlockSpec((H, H), lambda i: (0, 0)),        # w2^T
        pl.BlockSpec((H, 1), lambda i: (0, 0)),        # b2
        pl.BlockSpec((H, H), lambda i: (0, 0)),        # w3^T
        pl.BlockSpec((H, 1), lambda i: (0, 0)),        # b3
        pl.BlockSpec((A1, H), lambda i: (0, 0)),       # wo^T
        pl.BlockSpec((A1, 1), lambda i: (0, 0)),       # bo
    ]
    out_spec = pl.BlockSpec((1, Bp), lambda i: (0, 0))       # resident, lane-dense
    out_shape = jax.ShapeDtypeStruct((1, Bp), jnp.float32)
    operands = (x_t, act_row, mask_row,
                w1_t, b1_c, w2_t, b2_c, w3_t, b3_c, wo_t, bo_c)

    if nt == 1:
        # ---- single-step fast path: no scratch, no two-phase machinery ----
        def kernel_single(x_ref, act_ref, mask_ref,
                          w1_ref, b1_ref, w2_ref, b2_ref, w3_ref, b3_ref,
                          wo_ref, bo_ref, out_ref):
            mean, var = _mlp_head_t(x_ref[...], w1_ref[...], b1_ref[...],
                                    w2_ref[...], b2_ref[...],
                                    w3_ref[...], b3_ref[...],
                                    wo_ref[...], bo_ref[...])
            ev = (act_ref[...] - mean) * mask_ref[...]       # padded rows -> 0
            sse = jnp.sum(ev * ev, keepdims=True)            # (1, 1) whole-batch
            out_ref[...] = (-sse) * pl.reciprocal(2.0 * var, approx=False) \
                - 0.5 * jnp.log(var) - _HALF_LOG_2PI

        out = pl.pallas_call(
            kernel_single,
            grid=(1,),
            in_specs=in_specs,
            out_specs=out_spec,
            out_shape=out_shape,
            compiler_params=pltpu.CompilerParams(
                dimension_semantics=("arbitrary",)),
        )(*operands)
    else:
        # ---- tiled fallback (B > b_tile): serial two-phase accumulate -----
        def kernel_tiled(x_ref, act_ref, mask_ref,
                         w1_ref, b1_ref, w2_ref, b2_ref, w3_ref, b3_ref,
                         wo_ref, bo_ref, out_ref, var_buf, sse_acc):
            i = pl.program_id(0)

            @pl.when(i == 0)
            def _init():
                sse_acc[...] = jnp.zeros_like(sse_acc)

            mean, var = _mlp_head_t(x_ref[...], w1_ref[...], b1_ref[...],
                                    w2_ref[...], b2_ref[...],
                                    w3_ref[...], b3_ref[...],
                                    wo_ref[...], bo_ref[...])

            off = pl.multiple_of(i * bt, _LANE)
            var_buf[:, pl.ds(off, bt)] = var                  # lane-dense stash

            ev = (act_ref[...] - mean) * mask_ref[...]        # padding masked
            sse_acc[...] += jnp.sum(ev * ev, keepdims=True)

            @pl.when(i == nt - 1)
            def _finalize():
                v = var_buf[...]                              # (1, Bp)
                out_ref[...] = (-sse_acc[...]) * pl.reciprocal(2.0 * v, approx=False) \
                    - 0.5 * jnp.log(v) - _HALF_LOG_2PI

        out = pl.pallas_call(
            kernel_tiled,
            grid=(nt,),
            in_specs=in_specs,
            out_specs=out_spec,
            out_shape=out_shape,
            scratch_shapes=[
                pltpu.VMEM((1, Bp), jnp.float32),             # per-row variance
                pltpu.VMEM((1, 1), jnp.float32),              # running sse
            ],
            compiler_params=pltpu.CompilerParams(
                # sse couples every batch tile -> serial reduction axis.
                dimension_semantics=("arbitrary",)),
        )(*operands)

    return out[0, :B]


def init_params(key, state_size, action_size, hidden_layer):
    """Deterministic synthetic params. Weights stored (in, out); biases (1, out)."""
    dims = [(state_size + 1, hidden_layer),
            (hidden_layer, hidden_layer),
            (hidden_layer, hidden_layer),
            (hidden_layer, action_size + 1)]
    params = []
    for (din, dout) in dims:
        key, kw, kb = jax.random.split(key, 3)
        scale = 1.0 / jnp.sqrt(jnp.float32(din))
        w = jax.random.uniform(kw, (din, dout), jnp.float32, -scale, scale)
        b = jax.random.uniform(kb, (1, dout), jnp.float32, -scale, scale)
        params.append((w, b))
    return params


def _reference(state, action, optim, params):
    """Pure-JAX reference of the same (quirky) PyTorch semantics."""
    mm = lambda a, b: jnp.dot(a, b, precision=lax.Precision.HIGHEST)
    x = jnp.concatenate([state, optim.reshape(-1, 1)], axis=1)
    (w1, b1), (w2, b2), (w3, b3), (wo, bo) = params
    h = jnp.maximum(mm(x, w1) + b1, 0.0)
    h = jnp.maximum(mm(h, w2) + b2, 0.0)
    h = jnp.tanh(mm(h, w3) + b3)
    p = mm(h, wo) + bo
    mean = jnp.clip(p[:, 0], -2.0, 2.0)
    var = jnp.minimum(1.0, p[:, 1] ** 2) + 0.01
    expval = action.reshape(-1) - mean
    sse = jnp.sum(expval * expval)
    return -sse / (2.0 * var) - 0.5 * jnp.log(2.0 * 3.141592653 * var)


if __name__ == "__main__":
    state_size = 4
    action_size = 1
    hidden_layer = 32

    key = jax.random.PRNGKey(0)
    key, kp = jax.random.split(key)
    params = init_params(kp, state_size, action_size, hidden_layer)

    # (batch, b_tile): default single-step path, and a multi-tile + padding case.
    for batch, b_tile in ((8, 2048), (300, 128)):
        key, ks, ka, ko = jax.random.split(key, 4)
        state = jax.random.normal(ks, (batch, state_size), jnp.float32)
        action = jax.random.normal(ka, (batch,), jnp.float32)
        optim = jax.random.uniform(ko, (batch, 1), jnp.float32)

        log_prob = rws_cont_policy_forward(state, action, optim, params, b_tile=b_tile)
        jax.block_until_ready(log_prob)

        ref = _reference(state, action, optim, params)
        assert log_prob.shape == (batch,), log_prob.shape
        assert jnp.allclose(log_prob, ref, atol=1e-2, rtol=1e-3), (batch, log_prob, ref)

    print("KERNEL_OK")
</pallas_src>

<mosaic_0001>
module attributes {stable_mosaic.version = 11 : i64} {
  func.func @kernel_single(%arg0: i32, %arg1: memref<5x128xf32, #tpu.memory_space<vmem>>, %arg2: memref<1x128xf32, #tpu.memory_space<vmem>>, %arg3: memref<1x128xf32, #tpu.memory_space<vmem>>, %arg4: memref<32x5xf32, #tpu.memory_space<vmem>>, %arg5: memref<32x1xf32, #tpu.memory_space<vmem>>, %arg6: memref<32x32xf32, #tpu.memory_space<vmem>>, %arg7: memref<32x1xf32, #tpu.memory_space<vmem>>, %arg8: memref<32x32xf32, #tpu.memory_space<vmem>>, %arg9: memref<32x1xf32, #tpu.memory_space<vmem>>, %arg10: memref<2x32xf32, #tpu.memory_space<vmem>>, %arg11: memref<2x1xf32, #tpu.memory_space<vmem>>, %arg12: memref<1x128xf32, #tpu.memory_space<vmem>>) attributes {dimension_semantics = [#tpu.dimension_semantics<arbitrary>], iteration_bounds = array<i64: 1>, scalar_prefetch = 0 : i64, scratch_operands = 0 : i64, tpu.core_type = #tpu.core_type<tc>, window_params = [{transform_indices = @transform_0, window_bounds = array<i64: 5, 128>}, {transform_indices = @transform_1, window_bounds = array<i64: 1, 128>}, {transform_indices = @transform_2, window_bounds = array<i64: 1, 128>}, {pipeline_mode = #tpu.pipeline_mode<synchronous>, transform_indices = @transform_3, window_bounds = array<i64: 32, 5>}, {pipeline_mode = #tpu.pipeline_mode<synchronous>, transform_indices = @transform_4, window_bounds = array<i64: 32, 1>}, {pipeline_mode = #tpu.pipeline_mode<synchronous>, transform_indices = @transform_5, window_bounds = array<i64: 32, 32>}, {pipeline_mode = #tpu.pipeline_mode<synchronous>, transform_indices = @transform_6, window_bounds = array<i64: 32, 1>}, {pipeline_mode = #tpu.pipeline_mode<synchronous>, transform_indices = @transform_7, window_bounds = array<i64: 32, 32>}, {pipeline_mode = #tpu.pipeline_mode<synchronous>, transform_indices = @transform_8, window_bounds = array<i64: 32, 1>}, {pipeline_mode = #tpu.pipeline_mode<synchronous>, transform_indices = @transform_9, window_bounds = array<i64: 2, 32>}, {pipeline_mode = #tpu.pipeline_mode<synchronous>, transform_indices = @transform_10, window_bounds = array<i64: 2, 1>}, {pipeline_mode = #tpu.pipeline_mode<synchronous>, transform_indices = @transform_11, window_bounds = array<i64: 1, 128>}]} {
    %c0 = arith.constant 0 : index
    %c0_0 = arith.constant 0 : index
    %0 = vector.load %arg1[%c0, %c0_0] : memref<5x128xf32, #tpu.memory_space<vmem>>, vector<5x128xf32>
    %c0_1 = arith.constant 0 : index
    %c0_2 = arith.constant 0 : index
    %1 = vector.load %arg4[%c0_1, %c0_2] : memref<32x5xf32, #tpu.memory_space<vmem>>, vector<32x5xf32>
    %c0_3 = arith.constant 0 : index
    %c0_4 = arith.constant 0 : index
    %2 = vector.load %arg5[%c0_3, %c0_4] : memref<32x1xf32, #tpu.memory_space<vmem>>, vector<32x1xf32>
    %c0_5 = arith.constant 0 : index
    %c0_6 = arith.constant 0 : index
    %3 = vector.load %arg6[%c0_5, %c0_6] : memref<32x32xf32, #tpu.memory_space<vmem>>, vector<32x32xf32>
    %c0_7 = arith.constant 0 : index
    %c0_8 = arith.constant 0 : index
    %4 = vector.load %arg7[%c0_7, %c0_8] : memref<32x1xf32, #tpu.memory_space<vmem>>, vector<32x1xf32>
    %c0_9 = arith.constant 0 : index
    %c0_10 = arith.constant 0 : index
    %5 = vector.load %arg8[%c0_9, %c0_10] : memref<32x32xf32, #tpu.memory_space<vmem>>, vector<32x32xf32>
    %c0_11 = arith.constant 0 : index
    %c0_12 = arith.constant 0 : index
    %6 = vector.load %arg9[%c0_11, %c0_12] : memref<32x1xf32, #tpu.memory_space<vmem>>, vector<32x1xf32>
    %c0_13 = arith.constant 0 : index
    %c0_14 = arith.constant 0 : index
    %7 = vector.load %arg10[%c0_13, %c0_14] : memref<2x32xf32, #tpu.memory_space<vmem>>, vector<2x32xf32>
    %c0_15 = arith.constant 0 : index
    %c0_16 = arith.constant 0 : index
    %8 = vector.load %arg11[%c0_15, %c0_16] : memref<2x1xf32, #tpu.memory_space<vmem>>, vector<2x1xf32>
    %cst = arith.constant dense<0.000000e+00> : vector<32x128xf32>
    %9 = tpu.matmul %1, %0, %cst {dimension_numbers = #tpu.dot_dimension_numbers<[1], [0], [0], [1], [0, 0, 1, 1], [], []>} : vector<32x5xf32>, vector<5x128xf32>, vector<32x128xf32> -> vector<32x128xf32>
    %10 = vector.broadcast %2 : vector<32x1xf32> to vector<32x128xf32>
    %11 = arith.addf %9, %10 : vector<32x128xf32>
    %cst_17 = arith.constant 0.000000e+00 : f32
    %12 = vector.broadcast %cst_17 : f32 to vector<32x128xf32>
    %13 = arith.maximumf %11, %12 : vector<32x128xf32>
    %cst_18 = arith.constant dense<0.000000e+00> : vector<32x128xf32>
    %14 = tpu.matmul %3, %13, %cst_18 {dimension_numbers = #tpu.dot_dimension_numbers<[1], [0], [0], [1], [0, 0, 1, 1], [], []>} : vector<32x32xf32>, vector<32x128xf32>, vector<32x128xf32> -> vector<32x128xf32>
    %15 = vector.broadcast %4 : vector<32x1xf32> to vector<32x128xf32>
    %16 = arith.addf %14, %15 : vector<32x128xf32>
    %cst_19 = arith.constant 0.000000e+00 : f32
    %17 = vector.broadcast %cst_19 : f32 to vector<32x128xf32>
    %18 = arith.maximumf %16, %17 : vector<32x128xf32>
    %cst_20 = arith.constant dense<0.000000e+00> : vector<32x128xf32>
    %19 = tpu.matmul %5, %18, %cst_20 {dimension_numbers = #tpu.dot_dimension_numbers<[1], [0], [0], [1], [0, 0, 1, 1], [], []>} : vector<32x32xf32>, vector<32x128xf32>, vector<32x128xf32> -> vector<32x128xf32>
    %20 = vector.broadcast %6 : vector<32x1xf32> to vector<32x128xf32>
    %21 = arith.addf %19, %20 : vector<32x128xf32>
    %22 = math.tanh %21 : vector<32x128xf32>
    %cst_21 = arith.constant dense<0.000000e+00> : vector<2x128xf32>
    %23 = tpu.matmul %7, %22, %cst_21 {dimension_numbers = #tpu.dot_dimension_numbers<[1], [0], [0], [1], [0, 0, 1, 1], [], []>} : vector<2x32xf32>, vector<32x128xf32>, vector<2x128xf32> -> vector<2x128xf32>
    %24 = vector.broadcast %8 : vector<2x1xf32> to vector<2x128xf32>
    %25 = arith.addf %23, %24 : vector<2x128xf32>
    %26 = vector.extract_strided_slice %25 {offsets = [0, 0], sizes = [1, 128], strides = [1, 1]} : vector<2x128xf32> to vector<1x128xf32>
    %cst_22 = arith.constant -2.000000e+00 : f32
    %cst_23 = arith.constant 2.000000e+00 : f32
    %27 = vector.broadcast %cst_22 : f32 to vector<1x128xf32>
    %28 = arith.maximumf %27, %26 : vector<1x128xf32>
    %29 = vector.broadcast %cst_23 : f32 to vector<1x128xf32>
    %30 = arith.minimumf %29, %28 : vector<1x128xf32>
    %31 = vector.extract_strided_slice %25 {offsets = [1, 0], sizes = [1, 128], strides = [1, 1]} : vector<2x128xf32> to vector<1x128xf32>
    %32 = arith.mulf %31, %31 : vector<1x128xf32>
    %cst_24 = arith.constant 1.000000e+00 : f32
    %33 = vector.broadcast %cst_24 : f32 to vector<1x128xf32>
    %34 = arith.minimumf %33, %32 : vector<1x128xf32>
    %cst_25 = arith.constant 0.00999999977 : f32
    %35 = vector.broadcast %cst_25 : f32 to vector<1x128xf32>
    %36 = arith.addf %34, %35 : vector<1x128xf32>
    %c0_26 = arith.constant 0 : index
    %c0_27 = arith.constant 0 : index
    %37 = vector.load %arg2[%c0_26, %c0_27] : memref<1x128xf32, #tpu.memory_space<vmem>>, vector<1x128xf32>
    %38 = arith.subf %37, %30 : vector<1x128xf32>
    %c0_28 = arith.constant 0 : index
    %c0_29 = arith.constant 0 : index
    %39 = vector.load %arg3[%c0_28, %c0_29] : memref<1x128xf32, #tpu.memory_space<vmem>>, vector<1x128xf32>
    %40 = arith.mulf %38, %39 : vector<1x128xf32>
    %41 = arith.mulf %40, %40 : vector<1x128xf32>
    %42 = vector.shape_cast %41 : vector<1x128xf32> to vector<1x1x128xf32>
    %cst_30 = arith.constant dense<0.000000e+00> : vector<1xf32>
    %43 = vector.multi_reduction <add>, %42, %cst_30 [1, 2] : vector<1x1x128xf32> to vector<1xf32>
    %44 = vector.shape_cast %43 : vector<1xf32> to vector<1x1x1xf32>
    %45 = vector.extract %44[0, 0, 0] : f32 from vector<1x1x1xf32>
    %46 = vector.broadcast %45 : f32 to vector<1x1xf32>
    %cst_31 = arith.constant 0.000000e+00 : f32
    %47 = vector.broadcast %cst_31 : f32 to vector<1x1xf32>
    %48 = arith.subf %47, %46 : vector<1x1xf32>
    %cst_32 = arith.constant 2.000000e+00 : f32
    %49 = vector.broadcast %cst_32 : f32 to vector<1x128xf32>
    %50 = arith.mulf %49, %36 : vector<1x128xf32>
    %51 = tpu.reciprocal %50 : vector<1x128xf32> -> vector<1x128xf32>
    %52 = vector.broadcast %48 : vector<1x1xf32> to vector<1x128xf32>
    %53 = arith.mulf %52, %51 : vector<1x128xf32>
    %54 = math.log %36 : vector<1x128xf32>
    %cst_33 = arith.constant 5.000000e-01 : f32
    %55 = vector.broadcast %cst_33 : f32 to vector<1x128xf32>
    %56 = arith.mulf %55, %54 : vector<1x128xf32>
    %57 = arith.subf %53, %56 : vector<1x128xf32>
    %cst_34 = arith.constant 0.918938517 : f32
    %58 = vector.broadcast %cst_34 : f32 to vector<1x128xf32>
    %59 = arith.subf %57, %58 : vector<1x128xf32>
    %c0_35 = arith.constant 0 : index
    %c0_36 = arith.constant 0 : index
    %60 = vector.load %arg12[%c0_35, %c0_36] : memref<1x128xf32, #tpu.memory_space<vmem>>, vector<1x128xf32>
    tpu.vector_store %arg12[%c0_35, %c0_36], %59 {strides = array<i32>} : memref<1x128xf32, #tpu.memory_space<vmem>>, vector<1x128xf32>,
    return
  }
  func.func @transform_0(%arg0: i32) -> (i32, i32) {
    %c0_i32 = arith.constant 0 : i32
    %c0_i32_0 = arith.constant 0 : i32
    return %c0_i32, %arg0 : i32, i32
  }
  func.func @transform_1(%arg0: i32) -> (i32, i32) {
    %c0_i32 = arith.constant 0 : i32
    %c0_i32_0 = arith.constant 0 : i32
    return %c0_i32, %arg0 : i32, i32
  }
  func.func @transform_2(%arg0: i32) -> (i32, i32) {
    %c0_i32 = arith.constant 0 : i32
    %c0_i32_0 = arith.constant 0 : i32
    return %c0_i32, %arg0 : i32, i32
  }
  func.func @transform_3(%arg0: i32) -> (i32, i32) {
    %c0_i32 = arith.constant 0 : i32
    %c0_i32_0 = arith.constant 0 : i32
    %c0_i32_1 = arith.constant 0 : i32
    return %c0_i32, %c0_i32_0 : i32, i32
  }
  func.func @transform_4(%arg0: i32) -> (i32, i32) {
    %c0_i32 = arith.constant 0 : i32
    %c0_i32_0 = arith.constant 0 : i32
    %c0_i32_1 = arith.constant 0 : i32
    return %c0_i32, %c0_i32_0 : i32, i32
  }
  func.func @transform_5(%arg0: i32) -> (i32, i32) {
    %c0_i32 = arith.constant 0 : i32
    %c0_i32_0 = arith.constant 0 : i32
    %c0_i32_1 = arith.constant 0 : i32
    return %c0_i32, %c0_i32_0 : i32, i32
  }
  func.func @transform_6(%arg0: i32) -> (i32, i32) {
    %c0_i32 = arith.constant 0 : i32
    %c0_i32_0 = arith.constant 0 : i32
    %c0_i32_1 = arith.constant 0 : i32
    return %c0_i32, %c0_i32_0 : i32, i32
  }
  func.func @transform_7(%arg0: i32) -> (i32, i32) {
    %c0_i32 = arith.constant 0 : i32
    %c0_i32_0 = arith.constant 0 : i32
    %c0_i32_1 = arith.constant 0 : i32
    return %c0_i32, %c0_i32_0 : i32, i32
  }
  func.func @transform_8(%arg0: i32) -> (i32, i32) {
    %c0_i32 = arith.constant 0 : i32
    %c0_i32_0 = arith.constant 0 : i32
    %c0_i32_1 = arith.constant 0 : i32
    return %c0_i32, %c0_i32_0 : i32, i32
  }
  func.func @transform_9(%arg0: i32) -> (i32, i32) {
    %c0_i32 = arith.constant 0 : i32
    %c0_i32_0 = arith.constant 0 : i32
    %c0_i32_1 = arith.constant 0 : i32
    return %c0_i32, %c0_i32_0 : i32, i32
  }
  func.func @transform_10(%arg0: i32) -> (i32, i32) {
    %c0_i32 = arith.constant 0 : i32
    %c0_i32_0 = arith.constant 0 : i32
    %c0_i32_1 = arith.constant 0 : i32
    return %c0_i32, %c0_i32_0 : i32, i32
  }
  func.func @transform_11(%arg0: i32) -> (i32, i32) {
    %c0_i32 = arith.constant 0 : i32
    %c0_i32_0 = arith.constant 0 : i32
    %c0_i32_1 = arith.constant 0 : i32
    return %c0_i32, %c0_i32_0 : i32, i32
  }
}

</mosaic_0001>

<llo_original>
// kernel: tpu_custom_call.1
$region0: #{tpu_custom_call.1}
  #allocation0 [shape = 'u32[]', space=smem, size = 0x4, offset = 0x4, fixed_abs, tag = 'smem constant byte address 0x4 - core index']
  #allocation1 [shape = 'u32[144,128]{1,0:T(1,128)}', space=vmem, size = 0x12000, scoped, tag = 'internal scratch']
  %s0 = inlined_call_operand.vmem [shape: f32[5,128], index: 0, kind: input, shape index: {}]
  %s1 = inlined_call_operand.vmem [shape: f32[1,128], index: 1, kind: input, shape index: {}]
  %s2 = inlined_call_operand.vmem [shape: f32[1,128], index: 2, kind: input, shape index: {}]
  %s3 = inlined_call_operand.vmem [shape: f32[32,5], index: 3, kind: input, shape index: {}]
  %s4 = inlined_call_operand.vmem [shape: f32[32,1], index: 4, kind: input, shape index: {}]
  %s5 = inlined_call_operand.vmem [shape: f32[32,32], index: 5, kind: input, shape index: {}]
  %s6 = inlined_call_operand.vmem [shape: f32[32,1], index: 6, kind: input, shape index: {}]
  %s7 = inlined_call_operand.vmem [shape: f32[32,32], index: 7, kind: input, shape index: {}]
  %s8 = inlined_call_operand.vmem [shape: f32[32,1], index: 8, kind: input, shape index: {}]
  %s9 = inlined_call_operand.vmem [shape: f32[2,32], index: 9, kind: input, shape index: {}]
  %s10 = inlined_call_operand.vmem [shape: f32[2,1], index: 10, kind: input, shape index: {}]
  %s11 = inlined_call_operand.hbm [shape: f32[1,128], index: 11, kind: output, shape index: {}]
  %s12 = sld [smem:[#allocation0]]
  $region54: #{tpu_custom_call.1} parent=0
    _
  %s14 = ssub.s32 1, %s12
  %s15 = scalar_select 0, %s14, %s12
  $region1: #{tpu_custom_call.1} parent=0
    #allocation2 [shape = 'u8[512]{0}', space=vmem, size = 0x400, scoped, tag = 'output window, operand 0, single buffered']
    #allocation3 [shape = 's32[1]{0}', space=sflag, size = 0x4, scoped, tag = 'scoped memory for tpu_custom_call.1']
    %16 = vsyncpa [#allocation3], 0
    // Predicated region
    $region2: #{tpu_custom_call.1} parent=1 // pred_check
      _
    $region3: #{tpu_custom_call.1} parent=1 // pred_check_branch
      %18 = sbr.rel (0) target = $region5
    $region4: #{tpu_custom_call.1} parent=1 // pred_region
      _
    $region5: #{tpu_custom_call.1} parent=1 // pred_fallthru
      _
    // Predicated region
    $region6: #{tpu_custom_call.1} parent=1 // pred_check
      _
    $region7: #{tpu_custom_call.1} parent=1 // pred_check_branch
      %20 = sbr.rel (0) target = $region9
    $region8: #{tpu_custom_call.1} parent=1 // pred_region
      _
    $region9: #{tpu_custom_call.1} parent=1 // pred_fallthru
      _
    // Predicated region
    $region10: #{tpu_custom_call.1} parent=1 // pred_check
      _
    $region11: #{tpu_custom_call.1} parent=1 // pred_check_branch
      %22 = sbr.rel (0) target = $region13
    $region12: #{tpu_custom_call.1} parent=1 // pred_region
      _
    $region13: #{tpu_custom_call.1} parent=1 // pred_fallthru
      _
    // Predicated region
    $region14: #{tpu_custom_call.1} parent=1 // pred_check
      _
    $region15: #{tpu_custom_call.1} parent=1 // pred_check_branch
      %24 = sbr.rel (0) target = $region17
    $region16: #{tpu_custom_call.1} parent=1 // pred_region
      _
    $region17: #{tpu_custom_call.1} parent=1 // pred_fallthru
      _
    // Predicated region
    $region18: #{tpu_custom_call.1} parent=1 // pred_check
      _
    $region19: #{tpu_custom_call.1} parent=1 // pred_check_branch
      %26 = sbr.rel (0) target = $region21
    $region20: #{tpu_custom_call.1} parent=1 // pred_region
      _
    $region21: #{tpu_custom_call.1} parent=1 // pred_fallthru
      _
    // Predicated region
    $region22: #{tpu_custom_call.1} parent=1 // pred_check
      _
    $region23: #{tpu_custom_call.1} parent=1 // pred_check_branch
      %28 = sbr.rel (0) target = $region25
    $region24: #{tpu_custom_call.1} parent=1 // pred_region
      _
    $region25: #{tpu_custom_call.1} parent=1 // pred_fallthru
      _
    // Predicated region
    $region26: #{tpu_custom_call.1} parent=1 // pred_check
      _
    $region27: #{tpu_custom_call.1} parent=1 // pred_check_branch
      %30 = sbr.rel (0) target = $region29
    $region28: #{tpu_custom_call.1} parent=1 // pred_region
      _
    $region29: #{tpu_custom_call.1} parent=1 // pred_fallthru
      _
    // Predicated region
    $region30: #{tpu_custom_call.1} parent=1 // pred_check
      _
    $region31: #{tpu_custom_call.1} parent=1 // pred_check_branch
      %32 = sbr.rel (0) target = $region33
    $region32: #{tpu_custom_call.1} parent=1 // pred_region
      _
    $region33: #{tpu_custom_call.1} parent=1 // pred_fallthru
      _
    // Predicated region
    $region34: #{tpu_custom_call.1} parent=1 // pred_check
      _
    $region35: #{tpu_custom_call.1} parent=1 // pred_check_branch
      %34 = sbr.rel (0) target = $region37
    $region36: #{tpu_custom_call.1} parent=1 // pred_region
      _
    $region37: #{tpu_custom_call.1} parent=1 // pred_fallthru
      _
    // Predicated region
    $region38: #{tpu_custom_call.1} parent=1 // pred_check
      _
    $region39: #{tpu_custom_call.1} parent=1 // pred_check_branch
      %36 = sbr.rel (0) target = $region41
    $region40: #{tpu_custom_call.1} parent=1 // pred_region
      _
    $region41: #{tpu_custom_call.1} parent=1 // pred_fallthru
      _
    // Predicated region
    $region42: #{tpu_custom_call.1} parent=1 // pred_check
      _
    $region43: #{tpu_custom_call.1} parent=1 // pred_check_branch
      %38 = sbr.rel (0) target = $region45
    $region44: #{tpu_custom_call.1} parent=1 // pred_region
      _
    $region45: #{tpu_custom_call.1} parent=1 // pred_fallthru
      _
    %v39 = vld [vmem:[%s0] sm:$0x1f]
    %v40 = vld [vmem:[%s3] sm:$0xff]
    %v41 = vld [vmem:[%s3 + $0x8] sm:$0xff]
    %v42 = vld [vmem:[%s3 + $0x10] sm:$0xff]
    %v43 = vld [vmem:[%s3 + $0x18] sm:$0xff]
    %v44 = vld [vmem:[%s4] sm:$0xff]
    %v45 = vld [vmem:[%s4 + $0x8] sm:$0xff]
    %v46 = vld [vmem:[%s4 + $0x10] sm:$0xff]
    %v47 = vld [vmem:[%s4 + $0x18] sm:$0xff]
    %v48 = vld [vmem:[%s5] sm:$0xff]
    %v49 = vld [vmem:[%s5 + $0x8] sm:$0xff]
    %v50 = vld [vmem:[%s5 + $0x10] sm:$0xff]
    %v51 = vld [vmem:[%s5 + $0x18] sm:$0xff]
    %v52 = vld [vmem:[%s6] sm:$0xff]
    %v53 = vld [vmem:[%s6 + $0x8] sm:$0xff]
    %v54 = vld [vmem:[%s6 + $0x10] sm:$0xff]
    %v55 = vld [vmem:[%s6 + $0x18] sm:$0xff]
    %v56 = vld [vmem:[%s7] sm:$0xff]
    %v57 = vld [vmem:[%s7 + $0x8] sm:$0xff]
    %v58 = vld [vmem:[%s7 + $0x10] sm:$0xff]
    %v59 = vld [vmem:[%s7 + $0x18] sm:$0xff]
    %v60 = vld [vmem:[%s8] sm:$0xff]
    %v61 = vld [vmem:[%s8 + $0x8] sm:$0xff]
    %v62 = vld [vmem:[%s8 + $0x10] sm:$0xff]
    %v63 = vld [vmem:[%s8 + $0x18] sm:$0xff]
    %v64 = vld [vmem:[%s9] sm:$0x3]
    %v65 = vld [vmem:[%s10] sm:$0x3]
    %67 = vset.pattern.permute.xlu0 0
    %68 = vperm.xlu0 %67, %v44
    %v69 = vpop.permute.xlu0 %68
    %72 = vset.pattern.permute.xlu0 0
    %73 = vperm.xlu0 %72, %v45
    %v74 = vpop.permute.xlu0 %73
    %77 = vset.pattern.permute.xlu0 0
    %78 = vperm.xlu0 %77, %v46
    %v79 = vpop.permute.xlu0 %78
    %82 = vset.pattern.permute.xlu0 0
    %83 = vperm.xlu0 %82, %v47
    %v84 = vpop.permute.xlu0 %83
    %vm86 = vcmask 39936
    %v88 = vsel %vm86, %v40, 0
    %v91 = vsel %vm86, %v41, 0
    %v94 = vsel %vm86, %v42, 0
    %v97 = vsel %vm86, %v43, 0
    %vm99 = vcmask 1044480
    %v101 = vsel %vm99, %v39, 0
    %103 = vmatprep.subr.mxu0 0.0
    %104 = vmatpush1.msra.mxu0 %v101
    %105 = vmatprep.subr.mxu0 0.0
    %106 = vmatpush1.msra.mxu0 0.0
    %107 = vmatprep.subr.mxu0 0.0
    %108 = vmatpush1.msra.mxu0 0.0
    %109 = vmatprep.subr.mxu0 0.0
    %110 = vmatpush1.msra.mxu0 0.0
    %111 = vmatprep.subr.mxu0 0.0
    %112 = vmatpush1.msra.mxu0 0.0
    %113 = vmatprep.subr.mxu0 0.0
    %114 = vmatpush1.msra.mxu0 0.0
    %115 = vmatprep.subr.mxu0 0.0
    %116 = vmatpush1.msra.mxu0 0.0
    %117 = vmatprep.subr.mxu0 0.0
    %118 = vmatpush1.msra.mxu0 0.0
    %119 = vmatprep.subr.mxu0 0.0
    %120 = vmatpush1.msra.mxu0 0.0
    %121 = vmatprep.subr.mxu0 0.0
    %122 = vmatpush1.msra.mxu0 0.0
    %123 = vmatprep.subr.mxu0 0.0
    %124 = vmatpush1.msra.mxu0 0.0
    %125 = vmatprep.subr.mxu0 0.0
    %126 = vmatpush1.msra.mxu0 0.0
    %127 = vmatprep.subr.mxu0 0.0
    %128 = vmatpush1.msra.mxu0 0.0
    %129 = vmatprep.subr.mxu0 0.0
    %130 = vmatpush1.msra.mxu0 0.0
    %131 = vmatprep.subr.mxu0 0.0
    %132 = vmatpush1.msra.mxu0 0.0
    %133 = vmatprep.subr.mxu0 0.0
    %134 = vmatpush1.msra.mxu0 0.0
    %135 = vmatprep.subr.mxu0 0.0
    %136 = vmatpush1.msra.mxu0 0.0
    %137 = vmatprep.subr.mxu0 0.0
    %138 = vmatpush1.msra.mxu0 0.0
    %139 = vmatprep.subr.mxu0 0.0
    %140 = vmatpush1.msra.mxu0 0.0
    %141 = vmatprep.subr.mxu0 0.0
    %142 = vmatpush1.msra.mxu0 0.0
    %143 = vmatprep.subr.mxu0 0.0
    %144 = vmatpush1.msra.mxu0 0.0
    %145 = vmatprep.subr.mxu0 0.0
    %146 = vmatpush1.msra.mxu0 0.0
    %147 = vmatprep.subr.mxu0 0.0
    %148 = vmatpush1.msra.mxu0 0.0
    %149 = vmatprep.subr.mxu0 0.0
    %150 = vmatpush1.msra.mxu0 0.0
    %151 = vmatprep.subr.mxu0 0.0
    %152 = vmatpush1.msra.mxu0 0.0
    %153 = vmatprep.subr.mxu0 0.0
    %154 = vmatpush1.msra.mxu0 0.0
    %155 = vmatprep.subr.mxu0 0.0
    %156 = vmatpush1.msra.mxu0 0.0
    %157 = vmatprep.subr.mxu0 0.0
    %158 = vmatpush1.msra.mxu0 0.0
    %159 = vmatprep.subr.mxu0 0.0
    %160 = vmatpush1.msra.mxu0 0.0
    %161 = vmatprep.subr.mxu0 0.0
    %162 = vmatpush1.msra.mxu0 0.0
    %163 = vmatprep.subr.mxu0 0.0
    %164 = vmatpush1.msra.mxu0 0.0
    %165 = vmatprep.subr.mxu0 0.0
    %166 = vmatpush1.msra.mxu0 0.0
    %167 = vmatprep.mubr.f32.mxu0 0.0
    %168 = vmatmul.mubr.f32.gmra.mrb[0].mxu0 %v88
    %v169 = vpop.f32.mrb[0].mxu0
    %v170 = vadd.f32 %v69, %v169
    %v171 = vpop.f32.mrb[0].mxu0
    %172 = vmatprep.mubr.f32.mxu0 0.0
    %173 = vmatmul.mubr.f32.gmra.mrb[0].mxu0 %v91
    %v174 = vpop.f32.mrb[0].mxu0
    %v175 = vadd.f32 %v74, %v174
    %v176 = vpop.f32.mrb[0].mxu0
    %177 = vmatprep.mubr.f32.mxu0 0.0
    %178 = vmatmul.mubr.f32.gmra.mrb[0].mxu0 %v94
    %v179 = vpop.f32.mrb[0].mxu0
    %v180 = vadd.f32 %v79, %v179
    %v181 = vpop.f32.mrb[0].mxu0
    %182 = vmatprep.mubr.f32.mxu0 0.0
    %183 = vmatmul.mubr.f32.gmra.mrb[0].mxu0 %v97
    %v184 = vpop.f32.mrb[0].mxu0
    %v185 = vadd.f32 %v84, %v184
    %v186 = vpop.f32.mrb[0].mxu0
    %187 = vdwg.mxu0
    %v188 = vmax.f32 %v170, 0.0
    %v189 = vmax.f32 %v175, 0.0
    %v190 = vmax.f32 %v180, 0.0
    %v191 = vmax.f32 %v185, 0.0
    %193 = vset.pattern.permute.xlu0 0
    %194 = vperm.xlu0 %193, %v52
    %v195 = vpop.permute.xlu0 %194
    %198 = vset.pattern.permute.xlu0 0
    %199 = vperm.xlu0 %198, %v53
    %v200 = vpop.permute.xlu0 %199
    %203 = vset.pattern.permute.xlu0 0
    %204 = vperm.xlu0 %203, %v54
    %v205 = vpop.permute.xlu0 %204
    %208 = vset.pattern.permute.xlu0 0
    %209 = vperm.xlu0 %208, %v55
    %v210 = vpop.permute.xlu0 %209
    %vm212 = vcmask 261120
    %v214 = vsel %vm212, %v48, 0
    %v217 = vsel %vm212, %v49, 0
    %v220 = vsel %vm212, %v50, 0
    %v223 = vsel %vm212, %v51, 0
    %225 = vmatprep.subr.mxu0 0.0
    %226 = vmatpush1.msra.mxu0 %v188
    %227 = vmatprep.subr.mxu0 0.0
    %228 = vmatpush1.msra.mxu0 %v189
    %229 = vmatprep.subr.mxu0 0.0
    %230 = vmatpush1.msra.mxu0 %v190
    %231 = vmatprep.subr.mxu0 0.0
    %232 = vmatpush1.msra.mxu0 %v191
    %233 = vmatprep.subr.mxu0 0.0
    %234 = vmatpush1.msra.mxu0 0.0
    %235 = vmatprep.subr.mxu0 0.0
    %236 = vmatpush1.msra.mxu0 0.0
    %237 = vmatprep.subr.mxu0 0.0
    %238 = vmatpush1.msra.mxu0 0.0
    %239 = vmatprep.subr.mxu0 0.0
    %240 = vmatpush1.msra.mxu0 0.0
    %241 = vmatprep.subr.mxu0 0.0
    %242 = vmatpush1.msra.mxu0 0.0
    %243 = vmatprep.subr.mxu0 0.0
    %244 = vmatpush1.msra.mxu0 0.0
    %245 = vmatprep.subr.mxu0 0.0
    %246 = vmatpush1.msra.mxu0 0.0
    %247 = vmatprep.subr.mxu0 0.0
    %248 = vmatpush1.msra.mxu0 0.0
    %249 = vmatprep.subr.mxu0 0.0
    %250 = vmatpush1.msra.mxu0 0.0
    %251 = vmatprep.subr.mxu0 0.0
    %252 = vmatpush1.msra.mxu0 0.0
    %253 = vmatprep.subr.mxu0 0.0
    %254 = vmatpush1.msra.mxu0 0.0
    %255 = vmatprep.subr.mxu0 0.0
    %256 = vmatpush1.msra.mxu0 0.0
    %257 = vmatprep.subr.mxu0 0.0
    %258 = vmatpush1.msra.mxu0 0.0
    %259 = vmatprep.subr.mxu0 0.0
    %260 = vmatpush1.msra.mxu0 0.0
    %261 = vmatprep.subr.mxu0 0.0
    %262 = vmatpush1.msra.mxu0 0.0
    %263 = vmatprep.subr.mxu0 0.0
    %264 = vmatpush1.msra.mxu0 0.0
    %265 = vmatprep.subr.mxu0 0.0
    %266 = vmatpush1.msra.mxu0 0.0
    %267 = vmatprep.subr.mxu0 0.0
    %268 = vmatpush1.msra.mxu0 0.0
    %269 = vmatprep.subr.mxu0 0.0
    %270 = vmatpush1.msra.mxu0 0.0
    %271 = vmatprep.subr.mxu0 0.0
    %272 = vmatpush1.msra.mxu0 0.0
    %273 = vmatprep.subr.mxu0 0.0
    %274 = vmatpush1.msra.mxu0 0.0
    %275 = vmatprep.subr.mxu0 0.0
    %276 = vmatpush1.msra.mxu0 0.0
    %277 = vmatprep.subr.mxu0 0.0
    %278 = vmatpush1.msra.mxu0 0.0
    %279 = vmatprep.subr.mxu0 0.0
    %280 = vmatpush1.msra.mxu0 0.0
    %281 = vmatprep.subr.mxu0 0.0
    %282 = vmatpush1.msra.mxu0 0.0
    %283 = vmatprep.subr.mxu0 0.0
    %284 = vmatpush1.msra.mxu0 0.0
    %285 = vmatprep.subr.mxu0 0.0
    %286 = vmatpush1.msra.mxu0 0.0
    %287 = vmatprep.subr.mxu0 0.0
    %288 = vmatpush1.msra.mxu0 0.0
    %289 = vmatprep.mubr.f32.mxu0 0.0
    %290 = vmatmul.mubr.f32.gmra.mrb[0].mxu0 %v214
    %v291 = vpop.f32.mrb[0].mxu0
    %v292 = vadd.f32 %v195, %v291
    %v293 = vpop.f32.mrb[0].mxu0
    %294 = vmatprep.mubr.f32.mxu0 0.0
    %295 = vmatmul.mubr.f32.gmra.mrb[0].mxu0 %v217
    %v296 = vpop.f32.mrb[0].mxu0
    %v297 = vadd.f32 %v200, %v296
    %v298 = vpop.f32.mrb[0].mxu0
    %299 = vmatprep.mubr.f32.mxu0 0.0
    %300 = vmatmul.mubr.f32.gmra.mrb[0].mxu0 %v220
    %v301 = vpop.f32.mrb[0].mxu0
    %v302 = vadd.f32 %v205, %v301
    %v303 = vpop.f32.mrb[0].mxu0
    %304 = vmatprep.mubr.f32.mxu0 0.0
    %305 = vmatmul.mubr.f32.gmra.mrb[0].mxu0 %v223
    %v306 = vpop.f32.mrb[0].mxu0
    %v307 = vadd.f32 %v210, %v306
    %v308 = vpop.f32.mrb[0].mxu0
    %309 = vdwg.mxu0
    %v310 = vmax.f32 %v292, 0.0
    %v311 = vmax.f32 %v297, 0.0
    %v312 = vmax.f32 %v302, 0.0
    %v313 = vmax.f32 %v307, 0.0
    %315 = vset.pattern.permute.xlu0 0
    %316 = vperm.xlu0 %315, %v60
    %v317 = vpop.permute.xlu0 %316
    %320 = vset.pattern.permute.xlu0 0
    %321 = vperm.xlu0 %320, %v61
    %v322 = vpop.permute.xlu0 %321
    %325 = vset.pattern.permute.xlu0 0
    %326 = vperm.xlu0 %325, %v62
    %v327 = vpop.permute.xlu0 %326
    %330 = vset.pattern.permute.xlu0 0
    %331 = vperm.xlu0 %330, %v63
    %v332 = vpop.permute.xlu0 %331
    %v335 = vsel %vm212, %v56, 0
    %v338 = vsel %vm212, %v57, 0
    %v341 = vsel %vm212, %v58, 0
    %v344 = vsel %vm212, %v59, 0
    %346 = vmatprep.subr.mxu0 0.0
    %347 = vmatpush1.msra.mxu0 %v310
    %348 = vmatprep.subr.mxu0 0.0
    %349 = vmatpush1.msra.mxu0 %v311
    %350 = vmatprep.subr.mxu0 0.0
    %351 = vmatpush1.msra.mxu0 %v312
    %352 = vmatprep.subr.mxu0 0.0
    %353 = vmatpush1.msra.mxu0 %v313
    %354 = vmatprep.subr.mxu0 0.0
    %355 = vmatpush1.msra.mxu0 0.0
    %356 = vmatprep.subr.mxu0 0.0
    %357 = vmatpush1.msra.mxu0 0.0
    %358 = vmatprep.subr.mxu0 0.0
    %359 = vmatpush1.msra.mxu0 0.0
    %360 = vmatprep.subr.mxu0 0.0
    %361 = vmatpush1.msra.mxu0 0.0
    %362 = vmatprep.subr.mxu0 0.0
    %363 = vmatpush1.msra.mxu0 0.0
    %364 = vmatprep.subr.mxu0 0.0
    %365 = vmatpush1.msra.mxu0 0.0
    %366 = vmatprep.subr.mxu0 0.0
    %367 = vmatpush1.msra.mxu0 0.0
    %368 = vmatprep.subr.mxu0 0.0
    %369 = vmatpush1.msra.mxu0 0.0
    %370 = vmatprep.subr.mxu0 0.0
    %371 = vmatpush1.msra.mxu0 0.0
    %372 = vmatprep.subr.mxu0 0.0
    %373 = vmatpush1.msra.mxu0 0.0
    %374 = vmatprep.subr.mxu0 0.0
    %375 = vmatpush1.msra.mxu0 0.0
    %376 = vmatprep.subr.mxu0 0.0
    %377 = vmatpush1.msra.mxu0 0.0
    %378 = vmatprep.subr.mxu0 0.0
    %379 = vmatpush1.msra.mxu0 0.0
    %380 = vmatprep.subr.mxu0 0.0
    %381 = vmatpush1.msra.mxu0 0.0
    %382 = vmatprep.subr.mxu0 0.0
    %383 = vmatpush1.msra.mxu0 0.0
    %384 = vmatprep.subr.mxu0 0.0
    %385 = vmatpush1.msra.mxu0 0.0
    %386 = vmatprep.subr.mxu0 0.0
    %387 = vmatpush1.msra.mxu0 0.0
    %388 = vmatprep.subr.mxu0 0.0
    %389 = vmatpush1.msra.mxu0 0.0
    %390 = vmatprep.subr.mxu0 0.0
    %391 = vmatpush1.msra.mxu0 0.0
    %392 = vmatprep.subr.mxu0 0.0
    %393 = vmatpush1.msra.mxu0 0.0
    %394 = vmatprep.subr.mxu0 0.0
    %395 = vmatpush1.msra.mxu0 0.0
    %396 = vmatprep.subr.mxu0 0.0
    %397 = vmatpush1.msra.mxu0 0.0
    %398 = vmatprep.subr.mxu0 0.0
    %399 = vmatpush1.msra.mxu0 0.0
    %400 = vmatprep.subr.mxu0 0.0
    %401 = vmatpush1.msra.mxu0 0.0
    %402 = vmatprep.subr.mxu0 0.0
    %403 = vmatpush1.msra.mxu0 0.0
    %404 = vmatprep.subr.mxu0 0.0
    %405 = vmatpush1.msra.mxu0 0.0
    %406 = vmatprep.subr.mxu0 0.0
    %407 = vmatpush1.msra.mxu0 0.0
    %408 = vmatprep.subr.mxu0 0.0
    %409 = vmatpush1.msra.mxu0 0.0
    %410 = vmatprep.mubr.f32.mxu0 0.0
    %411 = vmatmul.mubr.f32.gmra.mrb[0].mxu0 %v335
    %v412 = vpop.f32.mrb[0].mxu0
    %v413 = vadd.f32 %v317, %v412
    %v414 = vpop.f32.mrb[0].mxu0
    %415 = vmatprep.mubr.f32.mxu0 0.0
    %416 = vmatmul.mubr.f32.gmra.mrb[0].mxu0 %v338
    %v417 = vpop.f32.mrb[0].mxu0
    %v418 = vadd.f32 %v322, %v417
    %v419 = vpop.f32.mrb[0].mxu0
    %420 = vmatprep.mubr.f32.mxu0 0.0
    %421 = vmatmul.mubr.f32.gmra.mrb[0].mxu0 %v341
    %v422 = vpop.f32.mrb[0].mxu0
    %v423 = vadd.f32 %v327, %v422
    %v424 = vpop.f32.mrb[0].mxu0
    %425 = vmatprep.mubr.f32.mxu0 0.0
    %426 = vmatmul.mubr.f32.gmra.mrb[0].mxu0 %v344
    %v427 = vpop.f32.mrb[0].mxu0
    %v428 = vadd.f32 %v332, %v427
    %v429 = vpop.f32.mrb[0].mxu0
    %430 = vdwg.mxu0
    %v431 = vtanh.pop %v413
    %v432 = vtanh.pop %v418
    %v433 = vtanh.pop %v423
    %v434 = vtanh.pop %v428
    %436 = vset.pattern.permute.xlu0 0
    %437 = vperm.xlu0 %436, %v65
    %v438 = vpop.permute.xlu0 %437
    %v441 = vsel %vm212, %v64, 0
    %443 = vmatprep.subr.mxu0 0.0
    %444 = vmatpush1.msra.mxu0 %v431
    %445 = vmatprep.subr.mxu0 0.0
    %446 = vmatpush1.msra.mxu0 %v432
    %447 = vmatprep.subr.mxu0 0.0
    %448 = vmatpush1.msra.mxu0 %v433
    %449 = vmatprep.subr.mxu0 0.0
    %450 = vmatpush1.msra.mxu0 %v434
    %451 = vmatprep.subr.mxu0 0.0
    %452 = vmatpush1.msra.mxu0 0.0
    %453 = vmatprep.subr.mxu0 0.0
    %454 = vmatpush1.msra.mxu0 0.0
    %455 = vmatprep.subr.mxu0 0.0
    %456 = vmatpush1.msra.mxu0 0.0
    %457 = vmatprep.subr.mxu0 0.0
    %458 = vmatpush1.msra.mxu0 0.0
    %459 = vmatprep.subr.mxu0 0.0
    %460 = vmatpush1.msra.mxu0 0.0
    %461 = vmatprep.subr.mxu0 0.0
    %462 = vmatpush1.msra.mxu0 0.0
    %463 = vmatprep.subr.mxu0 0.0
    %464 = vmatpush1.msra.mxu0 0.0
    %465 = vmatprep.subr.mxu0 0.0
    %466 = vmatpush1.msra.mxu0 0.0
    %467 = vmatprep.subr.mxu0 0.0
    %468 = vmatpush1.msra.mxu0 0.0
    %469 = vmatprep.subr.mxu0 0.0
    %470 = vmatpush1.msra.mxu0 0.0
    %471 = vmatprep.subr.mxu0 0.0
    %472 = vmatpush1.msra.mxu0 0.0
    %473 = vmatprep.subr.mxu0 0.0
    %474 = vmatpush1.msra.mxu0 0.0
    %475 = vmatprep.subr.mxu0 0.0
    %476 = vmatpush1.msra.mxu0 0.0
    %477 = vmatprep.subr.mxu0 0.0
    %478 = vmatpush1.msra.mxu0 0.0
    %479 = vmatprep.subr.mxu0 0.0
    %480 = vmatpush1.msra.mxu0 0.0
    %481 = vmatprep.subr.mxu0 0.0
    %482 = vmatpush1.msra.mxu0 0.0
    %483 = vmatprep.subr.mxu0 0.0
    %484 = vmatpush1.msra.mxu0 0.0
    %485 = vmatprep.subr.mxu0 0.0
    %486 = vmatpush1.msra.mxu0 0.0
    %487 = vmatprep.subr.mxu0 0.0
    %488 = vmatpush1.msra.mxu0 0.0
    %489 = vmatprep.subr.mxu0 0.0
    %490 = vmatpush1.msra.mxu0 0.0
    %491 = vmatprep.subr.mxu0 0.0
    %492 = vmatpush1.msra.mxu0 0.0
    %493 = vmatprep.subr.mxu0 0.0
    %494 = vmatpush1.msra.mxu0 0.0
    %495 = vmatprep.subr.mxu0 0.0
    %496 = vmatpush1.msra.mxu0 0.0
    %497 = vmatprep.subr.mxu0 0.0
    %498 = vmatpush1.msra.mxu0 0.0
    %499 = vmatprep.subr.mxu0 0.0
    %500 = vmatpush1.msra.mxu0 0.0
    %501 = vmatprep.subr.mxu0 0.0
    %502 = vmatpush1.msra.mxu0 0.0
    %503 = vmatprep.subr.mxu0 0.0
    %504 = vmatpush1.msra.mxu0 0.0
    %505 = vmatprep.subr.mxu0 0.0
    %506 = vmatpush1.msra.mxu0 0.0
    %507 = vmatprep.mubr.f32.mxu0 0.0
    %508 = vmatmul.mubr.f32.gmra.mrb[0].mxu0 %v441
    %v509 = vpop.f32.mrb[0].mxu0
    %v510 = vadd.f32 %v438, %v509
    %v511 = vpop.f32.mrb[0].mxu0
    %512 = vdwg.mxu0
    %v513 = vmax.f32 %v510, -2.0
    %v514 = vmin.f32 %v513, 2.0
    %v515 = vmul.f32 %v510, %v510
    %v516 = vmin.f32 %v515, 1.0
    %v517 = vadd.f32 %v516, 0.01
    %v518 = vld [vmem:[%s1] sm:$0x1]
    %v519 = vsub.f32 %v518, %v514
    %v520 = vld [vmem:[%s2] sm:$0x1]
    %v521 = vmul.f32 %v519, %v520
    %v522 = vmul.f32 %v521, %v521
    %vm523 = vcmask 1040384
    %v524 = vsel %vm523, %v522, 0.0
    %525 = vadd.xlane.f32.xlu0 %v524
    %v526 = vpop.xlane.xlu0 %525
    %v527 = vrot.slane %v526, 4
    %v528 = vadd.f32 %v526, %v527
    %v529 = vrot.slane %v528, 2
    %v530 = vadd.f32 %v528, %v529
    %v531 = vrot.slane %v530, 1
    %v532 = vadd.f32 %v530, %v531
    %s533 = vtos %v532
    %v534 = vstv %s533
    %v535 = vsub.f32 0.0, %v534
    %v536 = vmul.f32 %v517, 2.0
    %v537 = vrcp.pop %v536
    %v538 = vmul.f32 %v535, %v537
    %v539 = vlog2.pop %v517
    %v540 = vmul.f32 %v539, 0.6931472
    %v541 = vmul.f32 %v540, 0.5
    %v542 = vsub.f32 %v538, %v541
    %v543 = vsub.f32 %v542, 0.9189385
    %544 = vst [vmem:[#allocation2 - $0x1] sm:$0x2] %v543
    // Predicated region
    $region46: #{tpu_custom_call.1} parent=1 // pred_check
      _
    $region47: #{tpu_custom_call.1} parent=1 // pred_check_branch
      %546 = sbr.rel (0) target = $region49
    $region48: #{tpu_custom_call.1} parent=1 // pred_region
      %s548 = ssub.s32 16, 16
      %549 = vsyncadd [#allocation3], %s548
      %s551 = sshll.u32 [#allocation2], 4
      %s552 = int_to_ptr.vmem [resolvable:$true] %s551
      %554 = dma.vmem_to_hbm [thread:$0]  %s552, 16, %s11, [#allocation3]
    $region49: #{tpu_custom_call.1} parent=1 // pred_fallthru
      _
    // Predicated region
    $region50: #{tpu_custom_call.1} parent=1 // pred_check
      _
    $region51: #{tpu_custom_call.1} parent=1 // pred_check_branch
      %556 = sbr.rel (0) target = $region53
    $region52: #{tpu_custom_call.1} parent=1 // pred_region
      %557 = dma.done [#allocation3], 16
    $region53: #{tpu_custom_call.1} parent=1 // pred_fallthru
      _
    %558 = vsyncpa [#allocation3], 1

</llo_original>
